<compile_context>
chip_gen: v7x
topology: tpu7x:2x2x1
jax: 0.10.0
libtpu: 0.0.40
codegen_flags: <defaults>
</compile_context>

<pallas_src>
import functools

import jax
import jax.numpy as jnp
from jax.experimental import pallas as pl
from jax.experimental.pallas import tpu as pltpu

_LANE = 128


def _round_up(x, m):
    return (x + m - 1) // m * m


def _choose_tile_h(h, w_in, w_out, cin_p, cout_p, kh, k_dim, budget_bytes):
    """Largest divisor of `h` whose estimated VMEM working set fits the budget,
    preferring >= 2 row-tiles so the pipeline (and both v7x TensorCores) stay busy."""
    def vmem_estimate(t):
        in_block = (t + kh - 1) * w_in * cin_p * 4      # f32 input tile
        out_block = t * w_out * cout_p * 4              # f32 output tile
        patch = t * w_out * k_dim * 2                   # bf16 im2col staging
        acc = t * w_out * cout_p * 4                    # f32 accumulator
        return 2 * (in_block + out_block) + patch + acc  # double-buffered blocks
    divisors = [t for t in range(1, h + 1) if h % t == 0]
    fitting = [t for t in divisors if vmem_estimate(t) <= budget_bytes]
    if not fitting:
        return 1
    multi = [t for t in fitting if h // t >= 2]
    return max(multi) if multi else max(fitting)


def _fused_conv_kernel(x_ref, w_ref, b_ref, o_ref, *, kh, kw, pre_relu, activation):
    """Fused conv (as one im2col matmul) + bias + activation for one (batch, row-tile).

    x_ref: (1, 1, tile_h + kh - 1, w_out + kw - 1, cin_p)  haloed NHWC input tile
    w_ref: (kh*kw*cin_p, cout_p)   bf16 weights (scale already folded in)
    b_ref: (1, cout_p)             f32 bias
    o_ref: (1, tile_h, w_out, cout_p)
    """
    tile_h = o_ref.shape[1]
    w_out = o_ref.shape[2]
    cout_p = o_ref.shape[3]
    cin_p = x_ref.shape[4]

    def tap(dh, dw):
        win = x_ref[0, 0, dh:dh + tile_h, dw:dw + w_out, :]
        win = win.reshape(tile_h * w_out, cin_p)
        if pre_relu:                       # ResidualConvUnit applies ReLU *before* conv
            win = jnp.maximum(win, 0.0)
        return win.astype(jnp.bfloat16)

    taps = [tap(dh, dw) for dh in range(kh) for dw in range(kw)]
    # Single MXU matmul with K = kh*kw*cin_p (im2col staged in VMEM/vregs).
    patch = taps[0] if len(taps) == 1 else jnp.concatenate(taps, axis=-1)
    acc = jnp.dot(patch, w_ref[...], preferred_element_type=jnp.float32)

    y = acc + b_ref[...]
    if activation == "relu":
        y = jnp.maximum(y, 0.0)
    elif activation == "sigmoid":
        y = 1.0 / (1.0 + jnp.exp(-y))
    o_ref[...] = y.reshape(1, tile_h, w_out, cout_p).astype(o_ref.dtype)


def conv2d_nhwc(x, w_hwio, bias=None, *, pre_relu=False, activation="none",
                out_dtype=None, vmem_budget_bytes=12 * 1024 * 1024):
    """Stride-1 SAME Conv2d (+bias, +optional pre/post activation), NHWC in/out.

    All conv compute (im2col, matmul, bias, activation) runs inside one Pallas kernel,
    tiled over (batch, output-row tiles)."""
    n, h, w, cin = x.shape
    kh, kw, wcin, cout = w_hwio.shape
    assert wcin == cin
    assert kh == kw and kh in (1, 3), "DPTHead stride-1 convs here are 1x1 or 3x3"
    out_dtype = out_dtype or x.dtype

    multi_tap = kh * kw > 1
    cin_p = _round_up(cin, _LANE) if multi_tap else cin   # keeps im2col concat lane-aligned
    cout_p = _round_up(cout, _LANE)                       # lane-dense output stores
    k_dim = kh * kw * cin_p

    # Weights -> (K, cout_p) bf16 (zero padded channels); bias -> (1, cout_p) f32.
    w_p = jnp.pad(w_hwio.astype(jnp.float32),
                  ((0, 0), (0, 0), (0, cin_p - cin), (0, cout_p - cout)))
    w2d = w_p.reshape(k_dim, cout_p).astype(jnp.bfloat16)
    b = jnp.zeros((cout,), jnp.float32) if bias is None else bias.astype(jnp.float32)
    b2d = jnp.pad(b, (0, cout_p - cout)).reshape(1, cout_p)

    # SAME spatial padding + channel padding, once per conv in the wrapper.
    ph, pw = (kh - 1) // 2, (kw - 1) // 2
    x_pad = jnp.pad(x, ((0, 0), (ph, ph), (pw, pw), (0, cin_p - cin)))
    w_in = w + 2 * pw

    tile_h = _choose_tile_h(h, w_in, w, cin_p, cout_p, kh, k_dim, vmem_budget_bytes)
    n_th = h // tile_h
    halo = kh - 1
    if n_th == 1:
        x_tiles = x_pad[:, None]
    elif halo == 0:
        x_tiles = x_pad.reshape(n, n_th, tile_h, w_in, cin_p)
    else:
        # Disjoint per-tile slabs carrying a +halo row overlap (so plain Blocked
        # BlockSpecs tile them; only `halo` rows per tile are duplicated).
        x_tiles = jnp.stack(
            [x_pad[:, t * tile_h:t * tile_h + tile_h + halo] for t in range(n_th)],
            axis=1)

    kernel = functools.partial(_fused_conv_kernel, kh=kh, kw=kw,
                               pre_relu=pre_relu, activation=activation)

    out_padded = pl.pallas_call(
        kernel,
        out_shape=jax.ShapeDtypeStruct((n, h, w, cout_p), out_dtype),
        grid_spec=pltpu.PrefetchScalarGridSpec(
            num_scalar_prefetch=0,
            grid=(n, n_th),
            in_specs=[
                pl.BlockSpec((1, 1, tile_h + halo, w_in, cin_p),
                             lambda b, t: (b, t, 0, 0, 0)),
                pl.BlockSpec((k_dim, cout_p), lambda b, t: (0, 0)),
                pl.BlockSpec((1, cout_p), lambda b, t: (0, 0)),
            ],
            out_specs=pl.BlockSpec((1, tile_h, w, cout_p),
                                   lambda b, t: (b, t, 0, 0)),
        ),
        compiler_params=pltpu.CompilerParams(
            dimension_semantics=("parallel", "parallel"),
            vmem_limit_bytes=32 * 1024 * 1024),
    )(x_tiles, w2d, b2d)

    return out_padded[..., :cout]


def conv_bn_relu_nhwc(x, w_hwio, conv_bias, gamma, beta, running_mean, running_var,
                      eps=1e-5):
    """Conv2d + inference BatchNorm + ReLU: BN scale folded into the weights and the
    BN shift into the bias, so the kernel tail is just `+ bias; relu`."""
    s = gamma / jnp.sqrt(running_var + eps)
    w_folded = w_hwio * s[None, None, None, :]
    b_folded = beta + (conv_bias - running_mean) * s
    return conv2d_nhwc(x, w_folded, b_folded, activation="relu")


def residual_conv_unit_nhwc(x, w1, b1, w2, b2):
    """DPT ResidualConvUnit (use_bn=False): x + conv2(relu(conv1(relu(x)))).
    The pre-conv ReLUs are fused into the conv kernel (pre_relu=True)."""
    out = conv2d_nhwc(x, w1, b1, pre_relu=True)
    out = conv2d_nhwc(out, w2, b2, pre_relu=True)
    return out + x


def bilinear_resize_align_corners(x, out_h, out_w):
    """F.interpolate(mode='bilinear', align_corners=True) on NHWC input (plain-JAX glue)."""
    n, h, w, c = x.shape
    def coords(out_size, in_size):
        if out_size == 1:
            return jnp.zeros((out_size,), jnp.float32)
        return jnp.arange(out_size, dtype=jnp.float32) * (in_size - 1) / (out_size - 1)
    ys, xs = coords(out_h, h), coords(out_w, w)
    y0 = jnp.floor(ys).astype(jnp.int32)
    x0 = jnp.floor(xs).astype(jnp.int32)
    y1 = jnp.minimum(y0 + 1, h - 1)
    x1 = jnp.minimum(x0 + 1, w - 1)
    wy = (ys - y0)[None, :, None, None]
    wx = (xs - x0)[None, None, :, None]
    g00 = x[:, y0][:, :, x0]
    g01 = x[:, y0][:, :, x1]
    g10 = x[:, y1][:, :, x0]
    g11 = x[:, y1][:, :, x1]
    top = g00 * (1.0 - wx) + g01 * wx
    bot = g10 * (1.0 - wx) + g11 * wx
    return top * (1.0 - wy) + bot * wy


if __name__ == "__main__":
    key = jax.random.PRNGKey(0)
    ks = jax.random.split(key, 24)

    N, C_IN, PATCH_H, PATCH_W = 2, 4, 16, 16
    C_PROJ, FEATURES, HEAD1, HEAD2 = 8, 8, 4, 4     # tiny stand-ins for 1024/256/128/32

    def randn(k, shape, scale=0.1):
        return scale * jax.random.normal(k, shape, dtype=jnp.float32)

    def hwio(w_oihw):
        return jnp.transpose(w_oihw, (2, 3, 1, 0))

    x_nchw = jax.random.normal(ks[0], (N, C_IN, PATCH_H, PATCH_W), dtype=jnp.float32)

    # DPTHead-shaped parameters (PyTorch OIHW layout).
    w_proj = randn(ks[1], (C_PROJ, C_IN, 1, 1));        b_proj = randn(ks[2], (C_PROJ,))
    w_rn = randn(ks[3], (FEATURES, C_PROJ, 3, 3))                               # bias=False
    w_rcu1 = randn(ks[4], (FEATURES, FEATURES, 3, 3));  b_rcu1 = randn(ks[5], (FEATURES,))
    w_rcu2 = randn(ks[6], (FEATURES, FEATURES, 3, 3));  b_rcu2 = randn(ks[7], (FEATURES,))
    w_fuse = randn(ks[8], (FEATURES, FEATURES, 1, 1));  b_fuse = randn(ks[9], (FEATURES,))
    w_out1 = randn(ks[10], (HEAD1, FEATURES, 3, 3));    b_out1 = randn(ks[11], (HEAD1,))
    w_out2a = randn(ks[12], (HEAD2, HEAD1, 3, 3));      b_out2a = randn(ks[13], (HEAD2,))
    w_out2b = randn(ks[14], (1, HEAD2, 1, 1));          b_out2b = randn(ks[15], (1,))

    # ---- Pallas pipeline: NHWC end to end, NCHW only at the model boundary ----
    x = jnp.transpose(x_nchw, (0, 2, 3, 1))
    h = conv2d_nhwc(x, hwio(w_proj), b_proj)                      # projects[i] (1x1)
    # resize_layers[2] == nn.Identity() for this scale.
    rn = conv2d_nhwc(h, hwio(w_rn))                               # layerX_rn (3x3, no bias)
    rcu = residual_conv_unit_nhwc(rn, hwio(w_rcu1), b_rcu1, hwio(w_rcu2), b_rcu2)
    up = bilinear_resize_align_corners(rcu, 2 * PATCH_H, 2 * PATCH_W)   # fusion upsample
    fused = conv2d_nhwc(up, hwio(w_fuse), b_fuse)                 # fusion out_conv (1x1)
    o = conv2d_nhwc(fused, hwio(w_out1), b_out1)                  # output_conv1 (3x3)
    o = bilinear_resize_align_corners(o, 14 * PATCH_H, 14 * PATCH_W)
    o = conv2d_nhwc(o, hwio(w_out2a), b_out2a, activation="relu")       # output_conv2[0:2]
    o = conv2d_nhwc(o, hwio(w_out2b), b_out2b, activation="sigmoid")    # 1x1 + Sigmoid
    out = jnp.transpose(o, (0, 3, 1, 2))
    jax.block_until_ready(out)

    # ---- Pure-JAX reference (lax.conv, NCHW) ----
    def ref_conv(xr, wr, br=None, pre_relu=False, relu=False, sigmoid=False):
        if pre_relu:
            xr = jnp.maximum(xr, 0.0)
        y = jax.lax.conv_general_dilated(
            xr, wr, window_strides=(1, 1), padding="SAME",
            dimension_numbers=("NCHW", "OIHW", "NCHW"))
        if br is not None:
            y = y + br[None, :, None, None]
        if relu:
            y = jnp.maximum(y, 0.0)
        if sigmoid:
            y = 1.0 / (1.0 + jnp.exp(-y))
        return y

    def ref_resize(xr, oh, ow):
        t = jnp.transpose(xr, (0, 2, 3, 1))
        t = bilinear_resize_align_corners(t, oh, ow)
        return jnp.transpose(t, (0, 3, 1, 2))

    r_h = ref_conv(x_nchw, w_proj, b_proj)
    r_rn = ref_conv(r_h, w_rn)
    r_rcu = ref_conv(ref_conv(r_rn, w_rcu1, b_rcu1, pre_relu=True),
                     w_rcu2, b_rcu2, pre_relu=True) + r_rn
    r_up = ref_resize(r_rcu, 2 * PATCH_H, 2 * PATCH_W)
    r_fused = ref_conv(r_up, w_fuse, b_fuse)
    r_o = ref_conv(r_fused, w_out1, b_out1)
    r_o = ref_resize(r_o, 14 * PATCH_H, 14 * PATCH_W)
    r_o = ref_conv(r_o, w_out2a, b_out2a, relu=True)
    r_out = ref_conv(r_o, w_out2b, b_out2b, sigmoid=True)

    assert out.shape == (N, 1, 14 * PATCH_H, 14 * PATCH_W), out.shape
    rn_err = float(jnp.max(jnp.abs(jnp.transpose(rn, (0, 3, 1, 2)) - r_rn)))
    out_err = float(jnp.max(jnp.abs(out - r_out)))
    assert rn_err < 5e-2, f"layer_rn mismatch: {rn_err}"
    assert out_err < 5e-2, f"head output mismatch: {out_err}"

    # ---- ConvBlock-style conv + inference-BN + ReLU path (BN folded into weights) ----
    w_cb = randn(ks[16], (FEATURES, C_IN, 3, 3)); b_cb = randn(ks[17], (FEATURES,))
    gamma = 1.0 + randn(ks[18], (FEATURES,));     beta = randn(ks[19], (FEATURES,))
    mean = randn(ks[20], (FEATURES,));            var = 1.0 + jnp.abs(randn(ks[21], (FEATURES,)))
    cb = conv_bn_relu_nhwc(x, hwio(w_cb), b_cb, gamma, beta, mean, var)
    inv = gamma / jnp.sqrt(var + 1e-5)
    cb_ref = ref_conv(x_nchw, w_cb, b_cb)
    cb_ref = (cb_ref - mean[None, :, None, None]) * inv[None, :, None, None] \
        + beta[None, :, None, None]
    cb_ref = jnp.maximum(cb_ref, 0.0)
    cb_err = float(jnp.max(jnp.abs(jnp.transpose(cb, (0, 3, 1, 2)) - cb_ref)))
    assert cb_err < 5e-2, f"conv+bn+relu mismatch: {cb_err}"

    print("KERNEL_OK")
</pallas_src>

<mosaic_0001>
module attributes {stable_mosaic.version = 11 : i64} {
  func.func @_fused_conv_kernel(%arg0: i32, %arg1: i32, %arg2: memref<1x1x8x16x4xf32, #tpu.memory_space<vmem>>, %arg3: memref<4x128xbf16, #tpu.memory_space<vmem>>, %arg4: memref<1x128xf32, #tpu.memory_space<vmem>>, %arg5: memref<1x8x16x128xf32, #tpu.memory_space<vmem>>) attributes {dimension_semantics = [#tpu.dimension_semantics<parallel>, #tpu.dimension_semantics<parallel>], iteration_bounds = array<i64: 2, 2>, scalar_prefetch = 0 : i64, scratch_operands = 0 : i64, tpu.core_type = #tpu.core_type<tc>, window_params = [{transform_indices = @transform_0, window_bounds = array<i64: 1, 1, 8, 16, 4>}, {pipeline_mode = #tpu.pipeline_mode<synchronous>, transform_indices = @transform_1, window_bounds = array<i64: 4, 128>}, {pipeline_mode = #tpu.pipeline_mode<synchronous>, transform_indices = @transform_2, window_bounds = array<i64: 1, 128>}, {transform_indices = @transform_3, window_bounds = array<i64: 1, 8, 16, 128>}]} {
    %c0 = arith.constant 0 : index
    %c0_0 = arith.constant 0 : index
    %c0_1 = arith.constant 0 : index
    %c0_2 = arith.constant 0 : index
    %c0_3 = arith.constant 0 : index
    %0 = vector.load %arg2[%c0, %c0_0, %c0_1, %c0_2, %c0_3] : memref<1x1x8x16x4xf32, #tpu.memory_space<vmem>>, vector<1x1x8x16x4xf32>
    %1 = vector.shape_cast %0 : vector<1x1x8x16x4xf32> to vector<8x16x4xf32>
    %2 = vector.shape_cast %1 : vector<8x16x4xf32> to vector<128x4xf32>
    %3 = arith.truncf %2 : vector<128x4xf32> to vector<128x4xbf16>
    %c0_4 = arith.constant 0 : index
    %c0_5 = arith.constant 0 : index
    %4 = vector.load %arg3[%c0_4, %c0_5] : memref<4x128xbf16, #tpu.memory_space<vmem>>, vector<4x128xbf16>
    %cst = arith.constant dense<0.000000e+00> : vector<128x128xf32>
    %5 = tpu.matmul %3, %4, %cst {dimension_numbers = #tpu.dot_dimension_numbers<[1], [0], [0], [1], [0, 0, 1, 1], [], []>} : vector<128x4xbf16>, vector<4x128xbf16>, vector<128x128xf32> -> vector<128x128xf32>
    %c0_6 = arith.constant 0 : index
    %c0_7 = arith.constant 0 : index
    %6 = vector.load %arg4[%c0_6, %c0_7] : memref<1x128xf32, #tpu.memory_space<vmem>>, vector<1x128xf32>
    %7 = vector.broadcast %6 : vector<1x128xf32> to vector<128x128xf32>
    %8 = arith.addf %5, %7 : vector<128x128xf32>
    %9 = vector.shape_cast %8 : vector<128x128xf32> to vector<1x8x16x128xf32>
    %c0_8 = arith.constant 0 : index
    %c0_9 = arith.constant 0 : index
    %c0_10 = arith.constant 0 : index
    %c0_11 = arith.constant 0 : index
    %10 = vector.load %arg5[%c0_8, %c0_9, %c0_10, %c0_11] : memref<1x8x16x128xf32, #tpu.memory_space<vmem>>, vector<1x8x16x128xf32>
    tpu.vector_store %arg5[%c0_8, %c0_9, %c0_10, %c0_11], %9 {strides = array<i32>} : memref<1x8x16x128xf32, #tpu.memory_space<vmem>>, vector<1x8x16x128xf32>,
    return
  }
  func.func @transform_0(%arg0: i32, %arg1: i32) -> (i32, i32, i32, i32, i32) {
    %c0_i32 = arith.constant 0 : i32
    %c0_i32_0 = arith.constant 0 : i32
    %c0_i32_1 = arith.constant 0 : i32
    %c0_i32_2 = arith.constant 0 : i32
    return %arg0, %arg1, %c0_i32, %c0_i32_0, %c0_i32_1 : i32, i32, i32, i32, i32
  }
  func.func @transform_1(%arg0: i32, %arg1: i32) -> (i32, i32) {
    %c0_i32 = arith.constant 0 : i32
    %c0_i32_0 = arith.constant 0 : i32
    %c0_i32_1 = arith.constant 0 : i32
    return %c0_i32, %c0_i32_0 : i32, i32
  }
  func.func @transform_2(%arg0: i32, %arg1: i32) -> (i32, i32) {
    %c0_i32 = arith.constant 0 : i32
    %c0_i32_0 = arith.constant 0 : i32
    %c0_i32_1 = arith.constant 0 : i32
    return %c0_i32, %c0_i32_0 : i32, i32
  }
  func.func @transform_3(%arg0: i32, %arg1: i32) -> (i32, i32, i32, i32) {
    %c0_i32 = arith.constant 0 : i32
    %c0_i32_0 = arith.constant 0 : i32
    %c0_i32_1 = arith.constant 0 : i32
    return %arg0, %arg1, %c0_i32, %c0_i32_0 : i32, i32, i32, i32
  }
}

</mosaic_0001>

<llo_original>
// kernel: tpu_custom_call.1
$region0: #{tpu_custom_call.1}
  #allocation0 [shape = 'u32[]', space=smem, size = 0x4, offset = 0x4, fixed_abs, tag = 'smem constant byte address 0x4 - core index']
  #allocation1 [shape = 'u32[144,128]{1,0:T(1,128)}', space=vmem, size = 0x12000, scoped, tag = 'internal scratch']
  %s0 = inlined_call_operand.vmem [shape: f32[2,2,8,16,4], index: 0, kind: input, shape index: {}]
  %s1 = inlined_call_operand.vmem [shape: bf16[4,128], index: 1, kind: input, shape index: {}]
  %s2 = inlined_call_operand.vmem [shape: f32[1,128], index: 2, kind: input, shape index: {}]
  %s3 = inlined_call_operand.hbm [shape: f32[2,16,16,128], index: 3, kind: output, shape index: {}]
  %s4 = sld [smem:[#allocation0]]
  $region45: #{tpu_custom_call.1} parent=0
    _
  %s6 = ssub.s32 1, %s4
  %s7 = scalar_select 0, %s6, %s4
  $region1: #{tpu_custom_call.1} parent=0
    #allocation2 [shape = 'u8[131072]{0}', space=vmem, size = 0x20000, scoped, tag = 'output window, operand 0']
    #allocation3 [shape = 's32[2]{0}', space=sflag, size = 0x8, scoped, tag = 'scoped memory for tpu_custom_call.1']
    %8 = vsyncpa [#allocation3], 0
    %s9 = scalar_lea.sflag [#allocation3], 1
    %10 = vsyncpa %s9, 0
    loop: start=0, step=1, limit=6
    $region2: #{tpu_custom_call.1} parent=1 // loop_pre_header
      _
    $region3: #{tpu_custom_call.1} parent=1 // loop_header
      %s12 = sphi 0, %s16
      %p13 = scmp.ge.s32.totalorder %s12, 6
      %s19 = sphi 0, %s31
      %s20 = sphi 0, %s27
      %s21 = sphi 0, %s19
      %s22 = sphi 0, %s20
      %s23 = sphi 0, %s21
      %s24 = sphi 0, %s22
      %s36 = sphi 0, %s38
      %s39 = sphi 0, %s36
      %s40 = sphi 0, %s39
      %s56 = sphi 0, %s40
      %s60 = sphi 0, %s60
      %s62 = sphi 0, %s60
      %s63 = sphi 0, %s62
      %s77 = sphi 0, %s63
      %s81 = sphi 0, %s81
      %s83 = sphi 0, %s81
      %s84 = sphi 0, %s83
      %s98 = sphi 0, %s84
      %s106 = sphi 0, %s108
      %s109 = sphi 0, %s106
      %s110 = sphi 0, %s109
      %s126 = sphi 0, %s110
    $region4: #{tpu_custom_call.1} parent=1 // loop_header_branch
      %15 = sbr.rel (%p13) target = $region8
    $region5: #{tpu_custom_call.1} parent=1 // loop_body
      %s17 = ssub.s32 %s12, 1
      %s18 = ssub.s32 %s12, 2
      %s25 = sadd.s32 1, %s20
      %p26 = scmp.ge.s32.totalorder %s25, 2
      %s27 = scalar_select %p26, 0, %s25
      %s28 = sadd.s32 1, %s19
      %s29 = scalar_select %p26, %s28, %s19
      %p30 = scmp.ge.s32.totalorder %s29, 2
      %s31 = scalar_select %p30, 0, %s29
      %s32 = ssub.s32 %s19, %s31
      %s33 = ssub.s32 %s20, %s27
      %s34 = sor.u32 %s32, %s33
      %p35 = scmp.eq.s32.totalorder %s34, 0
      %s37 = sadd.s32 %s36, 1
      %s38 = scalar_select %p35, %s36, %s37
      %p41 = pneg %p35
      %p42 = scmp.eq.s32.totalorder %s12, 3
      %p43 = por %p41, %p42
      %p44 = scmp.ne.s32.totalorder %s36, %s39
      %p45 = scmp.eq.s32.totalorder %s12, 0
      %p46 = por %p44, %p45
      %p47 = scmp.ne.s32.totalorder %s36, %s39
      %p48 = scmp.eq.s32.totalorder %s17, 3
      %p49 = por %p47, %p48
      %p50 = scmp.ne.s32.totalorder %s39, %s40
      %p51 = scmp.eq.s32.totalorder %s17, 0
      %p52 = por %p50, %p51
      %p53 = scmp.ne.s32.totalorder %s39, %s40
      %p54 = scmp.eq.s32.totalorder %s18, 3
      %p55 = por %p53, %p54
      %p57 = scmp.ne.s32.totalorder %s40, %s56
      %p58 = scmp.eq.s32.totalorder %s18, 0
      %p59 = por %p57, %p58
      %s61 = sadd.s32 %s60, 1
      %p64 = scmp.eq.s32.totalorder %s12, 3
      %p65 = scmp.ne.s32.totalorder %s60, %s62
      %p66 = scmp.eq.s32.totalorder %s12, 0
      %p67 = por %p65, %p66
      %p68 = scmp.ne.s32.totalorder %s60, %s62
      %p69 = scmp.eq.s32.totalorder %s17, 3
      %p70 = por %p68, %p69
      %p71 = scmp.ne.s32.totalorder %s62, %s63
      %p72 = scmp.eq.s32.totalorder %s17, 0
      %p73 = por %p71, %p72
      %p74 = scmp.ne.s32.totalorder %s62, %s63
      %p75 = scmp.eq.s32.totalorder %s18, 3
      %p76 = por %p74, %p75
      %p78 = scmp.ne.s32.totalorder %s63, %s77
      %p79 = scmp.eq.s32.totalorder %s18, 0
      %p80 = por %p78, %p79
      %s82 = sadd.s32 %s81, 1
      %p85 = scmp.eq.s32.totalorder %s12, 3
      %p86 = scmp.ne.s32.totalorder %s81, %s83
      %p87 = scmp.eq.s32.totalorder %s12, 0
      %p88 = por %p86, %p87
      %p89 = scmp.ne.s32.totalorder %s81, %s83
      %p90 = scmp.eq.s32.totalorder %s17, 3
      %p91 = por %p89, %p90
      %p92 = scmp.ne.s32.totalorder %s83, %s84
      %p93 = scmp.eq.s32.totalorder %s17, 0
      %p94 = por %p92, %p93
      %p95 = scmp.ne.s32.totalorder %s83, %s84
      %p96 = scmp.eq.s32.totalorder %s18, 3
      %p97 = por %p95, %p96
      %p99 = scmp.ne.s32.totalorder %s84, %s98
      %p100 = scmp.eq.s32.totalorder %s18, 0
      %p101 = por %p99, %p100
      %s102 = ssub.s32 %s19, %s31
      %s103 = ssub.s32 %s20, %s27
      %s104 = sor.u32 %s102, %s103
      %p105 = scmp.eq.s32.totalorder %s104, 0
      %s107 = sadd.s32 %s106, 1
      %s108 = scalar_select %p105, %s106, %s107
      %p111 = pneg %p105
      %p112 = scmp.eq.s32.totalorder %s12, 3
      %p113 = por %p111, %p112
      %p114 = scmp.ne.s32.totalorder %s106, %s109
      %p115 = scmp.eq.s32.totalorder %s12, 0
      %p116 = por %p114, %p115
      %p117 = scmp.ne.s32.totalorder %s106, %s109
      %p118 = scmp.eq.s32.totalorder %s17, 3
      %p119 = por %p117, %p118
      %p120 = scmp.ne.s32.totalorder %s109, %s110
      %p121 = scmp.eq.s32.totalorder %s17, 0
      %p122 = por %p120, %p121
      %p123 = scmp.ne.s32.totalorder %s109, %s110
      %p124 = scmp.eq.s32.totalorder %s18, 3
      %p125 = por %p123, %p124
      %p127 = scmp.ne.s32.totalorder %s110, %s126
      %p128 = scmp.eq.s32.totalorder %s18, 0
      %p129 = por %p127, %p128
      %p130 = scmp.le.s32.totalorder 1, %s12
      %p131 = scmp.lt.s32.totalorder %s12, 5
      %p132 = pnand %p130, %p131
      %p133 = pneg %p132
      // Predicated region
      $region9: #{tpu_custom_call.1} parent=5 // pred_check
        _
      $region10: #{tpu_custom_call.1} parent=5 // pred_check_branch
        %135 = sbr.rel (%p132) target = $region12
      $region11: #{tpu_custom_call.1} parent=5 // pred_region
        %s136 = ssub.s32 %s12, 1
        // Predicated region
        $region13: #{tpu_custom_call.1} parent=11 // pred_check
          %p137 = pneg %p73
        $region14: #{tpu_custom_call.1} parent=11 // pred_check_branch
          %139 = sbr.rel (%p137) target = $region16
        $region15: #{tpu_custom_call.1} parent=11 // pred_region
          _
        $region16: #{tpu_custom_call.1} parent=11 // pred_fallthru
          _
        // Predicated region
        $region17: #{tpu_custom_call.1} parent=11 // pred_check
          %p140 = pneg %p94
        $region18: #{tpu_custom_call.1} parent=11 // pred_check_branch
          %142 = sbr.rel (%p140) target = $region20
        $region19: #{tpu_custom_call.1} parent=11 // pred_region
          _
        $region20: #{tpu_custom_call.1} parent=11 // pred_fallthru
          _
      $region12: #{tpu_custom_call.1} parent=5 // pred_fallthru
        _
      %p143 = scmp.lt.s32.totalorder %s12, 4
      // Predicated region
      $region21: #{tpu_custom_call.1} parent=5 // pred_check
        %p144 = pneg %p143
      $region22: #{tpu_custom_call.1} parent=5 // pred_check_branch
        %146 = sbr.rel (%p144) target = $region24
      $region23: #{tpu_custom_call.1} parent=5 // pred_region
        // Predicated region
        $region25: #{tpu_custom_call.1} parent=23 // pred_check
          %p147 = pneg %p46
        $region26: #{tpu_custom_call.1} parent=23 // pred_check_branch
          %149 = sbr.rel (%p147) target = $region28
        $region27: #{tpu_custom_call.1} parent=23 // pred_region
          %p150 = scmp.lt.s32.totalorder %s19, 1
          %s151 = scalar_select %p150, %s19, 1
          %p152 = scmp.lt.s32.totalorder %s20, 1
          %s153 = scalar_select %p152, %s20, 1
          %s154 = smul.addr %s153, 16
          %s155 = smul.addr %s151, 32
          %s156 = sadd.s32 %s154, %s155
          %s157 = smul.addr %s156, 8
          %s158 = scalar_lea.vmem %s0, %s157
        $region28: #{tpu_custom_call.1} parent=23 // pred_fallthru
          _
      $region24: #{tpu_custom_call.1} parent=5 // pred_fallthru
        _
      %p159 = scmp.le.s32.totalorder 1, %s12
      %p160 = scmp.lt.s32.totalorder %s12, 5
      %p161 = pnand %p159, %p160
      %p162 = pneg %p161
      // Predicated region
      $region29: #{tpu_custom_call.1} parent=5 // pred_check
        _
      $region30: #{tpu_custom_call.1} parent=5 // pred_check_branch
        %164 = sbr.rel (%p161) target = $region32
      $region31: #{tpu_custom_call.1} parent=5 // pred_region
        %s165 = ssub.s32 %s12, 1
        %p166 = scmp.lt.s32.totalorder %s21, 1
        %s167 = scalar_select %p166, %s21, 1
        %p168 = scmp.lt.s32.totalorder %s22, 1
        %s169 = scalar_select %p168, %s22, 1
        %s170 = smul.addr %s169, 16
        %s171 = smul.addr %s167, 32
        %s172 = sadd.s32 %s170, %s171
        %s173 = smul.addr %s172, 8
        %s174 = scalar_lea.vmem %s0, %s173
        %p175 = pneg %p52
        %p176 = pneg %p49
        %p177 = pneg %p73
        %p178 = pneg %p70
        %p179 = pneg %p94
        %p180 = pneg %p91
        %p181 = pneg %p122
        %p182 = pneg %p119
        %s183 = sand.u32 %s109, 1
        %s184 = scalar_lea.sflag [#allocation3], %s183
        %s185 = sand.u32 %s109, 1
        %s186 = smul.addr %s185, 128
        %s187 = scalar_lea.vmem [#allocation2], %s186
        %p188 = scmp.lt.s32.totalorder %s21, 1
        %s189 = scalar_select %p188, %s21, 1
        %p190 = scmp.lt.s32.totalorder %s22, 1
        %s191 = scalar_select %p190, %s22, 1
        %s192 = smul.addr %s191, 16
        %s193 = smul.addr %s189, 32
        %s194 = sadd.s32 %s192, %s193
        %s195 = smul.addr %s194, 8
        %s196 = scalar_lea.vmem %s0, %s195
        %s197 = smul.u32 8, %s22
        %v199 = vld [vmem:[%s196] sm:$0xff]
        %v200 = vld [vmem:[%s196 + $0x8] sm:$0xff]
        %v201 = vld [vmem:[%s196 + $0x10] sm:$0xff]
        %v202 = vld [vmem:[%s196 + $0x18] sm:$0xff]
        %v203 = vld [vmem:[%s196 + $0x20] sm:$0xff]
        %v204 = vld [vmem:[%s196 + $0x28] sm:$0xff]
        %v205 = vld [vmem:[%s196 + $0x30] sm:$0xff]
        %v206 = vld [vmem:[%s196 + $0x38] sm:$0xff]
        %v207 = vld [vmem:[%s196 + $0x40] sm:$0xff]
        %v208 = vld [vmem:[%s196 + $0x48] sm:$0xff]
        %v209 = vld [vmem:[%s196 + $0x50] sm:$0xff]
        %v210 = vld [vmem:[%s196 + $0x58] sm:$0xff]
        %v211 = vld [vmem:[%s196 + $0x60] sm:$0xff]
        %v212 = vld [vmem:[%s196 + $0x68] sm:$0xff]
        %v213 = vld [vmem:[%s196 + $0x70] sm:$0xff]
        %v214 = vld [vmem:[%s196 + $0x78] sm:$0xff]
        %v215 = vpack.c.bf16 %v200, %v199
        %v216 = vpack.c.bf16 %v202, %v201
        %v217 = vpack.c.bf16 %v204, %v203
        %v218 = vpack.c.bf16 %v206, %v205
        %v219 = vpack.c.bf16 %v208, %v207
        %v220 = vpack.c.bf16 %v210, %v209
        %v221 = vpack.c.bf16 %v212, %v211
        %v222 = vpack.c.bf16 %v214, %v213
        %v223 = vld [vmem:[%s1] sm:$0x3]
        %v224 = vld [vmem:[%s2] sm:$0x1]
        %v226 = vlaneseq
        %v227 = vshrl.u32 %v226, 7
        %v228 = vsub.s32 0, %v227
        %v229 = vrot.slane %v224, %v228
        %vm231 = vcmask 31744
        %v233 = vsel %vm231, %v215, 0
        %v236 = vsel %vm231, %v216, 0
        %v239 = vsel %vm231, %v217, 0
        %v242 = vsel %vm231, %v218, 0
        %v245 = vsel %vm231, %v219, 0
        %v248 = vsel %vm231, %v220, 0
        %v251 = vsel %vm231, %v221, 0
        %v254 = vsel %vm231, %v222, 0
        %vm256 = vcmask 1041408
        %v258 = vsel %vm256, %v223, 0
        %260 = vmatprep.subr.bf16.mxu0 0
        %261 = vmatpush1.bf16.msra.mxu0 %v258
        %262 = vmatprep.subr.bf16.mxu0 0
        %263 = vmatpush1.bf16.msra.mxu0 0
        %264 = vmatprep.subr.bf16.mxu0 0
        %265 = vmatpush1.bf16.msra.mxu0 0
        %266 = vmatprep.subr.bf16.mxu0 0
        %267 = vmatpush1.bf16.msra.mxu0 0
        %268 = vmatprep.subr.bf16.mxu0 0
        %269 = vmatpush1.bf16.msra.mxu0 0
        %270 = vmatprep.subr.bf16.mxu0 0
        %271 = vmatpush1.bf16.msra.mxu0 0
        %272 = vmatprep.subr.bf16.mxu0 0
        %273 = vmatpush1.bf16.msra.mxu0 0
        %274 = vmatprep.subr.bf16.mxu0 0
        %275 = vmatpush1.bf16.msra.mxu0 0
        %276 = vmatprep.subr.bf16.mxu0 0
        %277 = vmatpush1.bf16.msra.mxu0 0
        %278 = vmatprep.subr.bf16.mxu0 0
        %279 = vmatpush1.bf16.msra.mxu0 0
        %280 = vmatprep.subr.bf16.mxu0 0
        %281 = vmatpush1.bf16.msra.mxu0 0
        %282 = vmatprep.subr.bf16.mxu0 0
        %283 = vmatpush1.bf16.msra.mxu0 0
        %284 = vmatprep.subr.bf16.mxu0 0
        %285 = vmatpush1.bf16.msra.mxu0 0
        %286 = vmatprep.subr.bf16.mxu0 0
        %287 = vmatpush1.bf16.msra.mxu0 0
        %288 = vmatprep.subr.bf16.mxu0 0
        %289 = vmatpush1.bf16.msra.mxu0 0
        %290 = vmatprep.subr.bf16.mxu0 0
        %291 = vmatpush1.bf16.msra.mxu0 0
        %292 = vmatprep.mubr.bf16.mxu0 0
        %293 = vmatmul.mubr.bf16.gmra.mrb[0].mxu0 %v233
        %v294 = vpop.f32.mrb[0].mxu0
        %v295 = vadd.f32 %v229, %v294
        %v296 = vpop.f32.mrb[0].mxu0
        %v297 = vpop.f32.mrb[0].mxu0
        %v298 = vadd.f32 %v229, %v297
        %v299 = vpop.f32.mrb[0].mxu0
        %300 = vmatprep.mubr.bf16.mxu0 0
        %301 = vmatmul.mubr.bf16.gmra.mrb[0].mxu0 %v236
        %v302 = vpop.f32.mrb[0].mxu0
        %v303 = vadd.f32 %v229, %v302
        %v304 = vpop.f32.mrb[0].mxu0
        %v305 = vpop.f32.mrb[0].mxu0
        %v306 = vadd.f32 %v229, %v305
        %v307 = vpop.f32.mrb[0].mxu0
        %308 = vmatprep.mubr.bf16.mxu0 0
        %309 = vmatmul.mubr.bf16.gmra.mrb[0].mxu0 %v239
        %v310 = vpop.f32.mrb[0].mxu0
        %v311 = vadd.f32 %v229, %v310
        %v312 = vpop.f32.mrb[0].mxu0
        %v313 = vpop.f32.mrb[0].mxu0
        %v314 = vadd.f32 %v229, %v313
        %v315 = vpop.f32.mrb[0].mxu0
        %316 = vmatprep.mubr.bf16.mxu0 0
        %317 = vmatmul.mubr.bf16.gmra.mrb[0].mxu0 %v242
        %v318 = vpop.f32.mrb[0].mxu0
        %v319 = vadd.f32 %v229, %v318
        %v320 = vpop.f32.mrb[0].mxu0
        %v321 = vpop.f32.mrb[0].mxu0
        %v322 = vadd.f32 %v229, %v321
        %v323 = vpop.f32.mrb[0].mxu0
        %324 = vmatprep.mubr.bf16.mxu0 0
        %325 = vmatmul.mubr.bf16.gmra.mrb[0].mxu0 %v245
        %v326 = vpop.f32.mrb[0].mxu0
        %v327 = vadd.f32 %v229, %v326
        %v328 = vpop.f32.mrb[0].mxu0
        %v329 = vpop.f32.mrb[0].mxu0
        %v330 = vadd.f32 %v229, %v329
        %v331 = vpop.f32.mrb[0].mxu0
        %332 = vmatprep.mubr.bf16.mxu0 0
        %333 = vmatmul.mubr.bf16.gmra.mrb[0].mxu0 %v248
        %v334 = vpop.f32.mrb[0].mxu0
        %v335 = vadd.f32 %v229, %v334
        %v336 = vpop.f32.mrb[0].mxu0
        %v337 = vpop.f32.mrb[0].mxu0
        %v338 = vadd.f32 %v229, %v337
        %v339 = vpop.f32.mrb[0].mxu0
        %340 = vmatprep.mubr.bf16.mxu0 0
        %341 = vmatmul.mubr.bf16.gmra.mrb[0].mxu0 %v251
        %v342 = vpop.f32.mrb[0].mxu0
        %v343 = vadd.f32 %v229, %v342
        %v344 = vpop.f32.mrb[0].mxu0
        %v345 = vpop.f32.mrb[0].mxu0
        %v346 = vadd.f32 %v229, %v345
        %v347 = vpop.f32.mrb[0].mxu0
        %348 = vmatprep.mubr.bf16.mxu0 0
        %349 = vmatmul.mubr.bf16.gmra.mrb[0].mxu0 %v254
        %v350 = vpop.f32.mrb[0].mxu0
        %v351 = vadd.f32 %v229, %v350
        %v352 = vpop.f32.mrb[0].mxu0
        %v353 = vpop.f32.mrb[0].mxu0
        %v354 = vadd.f32 %v229, %v353
        %v355 = vpop.f32.mrb[0].mxu0
        %356 = vdwg.mxu0
        %357 = vst [vmem:[%s187] sm:$0xff] %v295
        %358 = vst [vmem:[%s187 + $0x8] sm:$0xff] %v298
        %359 = vst [vmem:[%s187 + $0x10] sm:$0xff] %v303
        %360 = vst [vmem:[%s187 + $0x18] sm:$0xff] %v306
        %361 = vst [vmem:[%s187 + $0x20] sm:$0xff] %v311
        %362 = vst [vmem:[%s187 + $0x28] sm:$0xff] %v314
        %363 = vst [vmem:[%s187 + $0x30] sm:$0xff] %v319
        %364 = vst [vmem:[%s187 + $0x38] sm:$0xff] %v322
        %365 = vst [vmem:[%s187 + $0x40] sm:$0xff] %v327
        %366 = vst [vmem:[%s187 + $0x48] sm:$0xff] %v330
        %367 = vst [vmem:[%s187 + $0x50] sm:$0xff] %v335
        %368 = vst [vmem:[%s187 + $0x58] sm:$0xff] %v338
        %369 = vst [vmem:[%s187 + $0x60] sm:$0xff] %v343
        %370 = vst [vmem:[%s187 + $0x68] sm:$0xff] %v346
        %371 = vst [vmem:[%s187 + $0x70] sm:$0xff] %v351
        %372 = vst [vmem:[%s187 + $0x78] sm:$0xff] %v354
        %s373 = sand.u32 %s109, 1
        %s374 = scalar_lea.sflag [#allocation3], %s373
        %s375 = sand.u32 %s109, 1
        %s376 = smul.addr %s375, 128
        %s377 = scalar_lea.vmem [#allocation2], %s376
        // Predicated region
        $region33: #{tpu_custom_call.1} parent=31 // pred_check
          %p378 = pneg %p119
        $region34: #{tpu_custom_call.1} parent=31 // pred_check_branch
          %380 = sbr.rel (%p378) target = $region36
        $region35: #{tpu_custom_call.1} parent=31 // pred_region
          %s381 = smul.u32 8, %s22
          %s383 = ssub.s32 2048, 2048
          %384 = vsyncadd %s374, %s383
          %s385 = smul.addr %s381, 2
          %s386 = smul.addr %s21, 32
          %s387 = sadd.s32 %s385, %s386
          %s388 = smul.addr %s387, 128
          %s389 = scalar_lea.hbm %s3, %s388
          %s390 = sshll.u32 %s377, 4
          %s391 = int_to_ptr.vmem [resolvable:$true] %s390
          %396 = dma.vmem_to_hbm [thread:$0]  %s391, 2048, %s389, %s374, 128, 128, 8
        $region36: #{tpu_custom_call.1} parent=31 // pred_fallthru
          _
      $region32: #{tpu_custom_call.1} parent=5 // pred_fallthru
        _
      %p397 = scmp.le.s32.totalorder 2, %s12
      // Predicated region
      $region37: #{tpu_custom_call.1} parent=5 // pred_check
        %p398 = pneg %p397
      $region38: #{tpu_custom_call.1} parent=5 // pred_check_branch
        %400 = sbr.rel (%p398) target = $region40
      $region39: #{tpu_custom_call.1} parent=5 // pred_region
        %s401 = ssub.s32 %s12, 2
        // Predicated region
        $region41: #{tpu_custom_call.1} parent=39 // pred_check
          %p402 = pneg %p125
        $region42: #{tpu_custom_call.1} parent=39 // pred_check_branch
          %404 = sbr.rel (%p402) target = $region44
        $region43: #{tpu_custom_call.1} parent=39 // pred_region
          %s405 = sand.u32 %s110, 1
          %s406 = scalar_lea.sflag [#allocation3], %s405
          %s407 = sand.u32 %s110, 1
          %s408 = smul.addr %s407, 128
          %s409 = scalar_lea.vmem [#allocation2], %s408
          %410 = dma.done %s406, 2048
        $region44: #{tpu_custom_call.1} parent=39 // pred_fallthru
          _
      $region40: #{tpu_custom_call.1} parent=5 // pred_fallthru
        _
    $region6: #{tpu_custom_call.1} parent=1 // loop_footer
      %s16 = sadd.s32 1, %s12
    $region7: #{tpu_custom_call.1} parent=1 // loop_footer_branch
      %11 = sbr.rel target = $region3
    $region8: #{tpu_custom_call.1} parent=1 // loop_exit
      _
    %411 = vsyncpa [#allocation3], 1
    %s412 = scalar_lea.sflag [#allocation3], 1
    %413 = vsyncpa %s412, 1

</llo_original>
